<compile_context>
chip_gen: v7x
topology: tpu7x:2x2x1
jax: 0.10.0
libtpu: 0.0.40
codegen_flags: <defaults>
</compile_context>

<pallas_src>
import functools

import jax
import jax.numpy as jnp
from jax.experimental import pallas as pl
from jax.experimental.pallas import tpu as pltpu

LANE = 128


def _round_up(n, m):
    return ((n + m - 1) // m) * m


def _pad_last(arr, target, value=0.0):
    """Zero/value-pad the last dim of `arr` up to `target` columns."""
    pad = [(0, 0)] * (arr.ndim - 1) + [(0, target - arr.shape[-1])]
    return jnp.pad(arr, pad, constant_values=value)


# ----------------------------------------------------------------------------- kernel
def dgcnn_kernel(a_ref, x_ref, rs_ref, wk_ref, bk_ref, w12_ref, b12_ref,
                 out_ref, *, cheb_k):
    a = a_ref[0]                        # scalar: 2*sum(relu(w))/lambda_max - 1 (SMEM)
    x = x_ref[...]                      # [B, F]  f32
    rs = rs_ref[...]                    # [B, 1]  f32  = (2/lambda_max) * relu(w)

    def lhat_mul(t):
        # L_hat @ t without the [B,B] Laplacian:
        #   every adjacency row == edge_weight  =>  L_hat = a*I - ones @ rs^T
        #   =>  L_hat t = a*t - broadcast(rs^T t)
        rt = jnp.sum(rs * t, axis=0, keepdims=True)       # [1, F]
        return a * t - rt

    # Fused ChebConv + 1x1 Conv1d projection, accumulated per Chebyshev order
    # (no lane-unaligned concat):  acc = b' + sum_k T_k @ (Wcheb_k @ Wconv).
    acc = bk_ref[...] + jnp.dot(x.astype(jnp.bfloat16), wk_ref[0],
                                preferred_element_type=jnp.float32)    # [B, CONV_P]
    if cheb_k > 1:
        t_prev, t_cur = x, lhat_mul(x)                    # T_0, T_1 (f32 state)
        acc = acc + jnp.dot(t_cur.astype(jnp.bfloat16), wk_ref[1],
                            preferred_element_type=jnp.float32)
        for k in range(2, cheb_k):                        # static K -> unrolled
            t_next = 2.0 * lhat_mul(t_cur) - t_prev
            acc = acc + jnp.dot(t_next.astype(jnp.bfloat16), wk_ref[k],
                                preferred_element_type=jnp.float32)
            t_prev, t_cur = t_cur, t_next

    h = jnp.maximum(acc, 0.0)           # relu(conv1d(cheb)) == flatten here (f32 VPU)

    # Fused fc1 @ fc2 (no nonlinearity between them in the reference fc_module).
    logits = (jnp.dot(h.astype(jnp.bfloat16), w12_ref[...],
                      preferred_element_type=jnp.float32) + b12_ref[...])  # [B, OUT_P]

    # softmax(dim=1): padded logit lanes hold -1e30 (baked into the bias padding),
    # so exp underflows to exactly 0 — no in-kernel iota / compare / select mask.
    m = jnp.max(logits, axis=1, keepdims=True)
    e = jnp.exp(logits - m)
    denom = jnp.sum(e, axis=1, keepdims=True)
    out_ref[...] = e * pl.reciprocal(denom, approx=True)  # divide on the EUP slot


# ------------------------------------------------------------------------------- glue
@functools.partial(jax.jit, static_argnames=("batch_size",))
def dgcnn_forward(x, edge_weight, params, *, batch_size):
    B = batch_size
    K, F, _hid = params["wcheb"].shape
    conv_out = params["wconv"].shape[1]
    out_channels = params["wfc2"].shape[1]

    CONV_P = _round_up(conv_out, LANE)
    OUT_P = _round_up(out_channels, LANE)

    # --- affine fusion of the weight chain (exact: no activations in between) -------
    wk = jnp.einsum("kfh,hc->kfc", params["wcheb"], params["wconv"])   # [K, F, conv_out]
    bk = params["bcheb"] @ params["wconv"] + params["bconv"]            # [1, conv_out]
    w12 = params["wfc1"] @ params["wfc2"]                               # [conv_out, out]
    b12 = params["bfc1"] @ params["wfc2"] + params["bfc2"]              # [1, out]

    # Lane-dense padding; the -1e30 bias pad doubles as the softmax lane mask.
    wk_p = _pad_last(wk, CONV_P).astype(jnp.bfloat16)
    bk_p = _pad_last(bk, CONV_P).astype(jnp.float32)
    w12_p = jnp.pad(w12, ((0, CONV_P - conv_out),
                          (0, OUT_P - out_channels))).astype(jnp.bfloat16)
    b12_p = _pad_last(b12, OUT_P, value=-1e30).astype(jnp.float32)

    # --- graph glue: rank-1 adjacency structure --------------------------------------
    # edge_attr = edge_weight.repeat(B) -> every adjacency row equals edge_weight, so
    # L = D - A = sum(w)*I - ones @ w^T (self-loops dropped by get_laplacian).  Its
    # spectrum is {0, sum(w)}  =>  LaplacianLambdaMax is exactly sum(edge_weight).
    w = edge_weight.astype(jnp.float32)
    lam = jnp.sum(w)
    # ChebConv uses relu(edge_attr):  L_hat = 2*(D_r - A_r)/lam - I = a*I - ones @ rs^T
    r = jnp.maximum(w, 0.0)
    a = 2.0 * jnp.sum(r) / lam - 1.0
    rs = ((2.0 / lam) * r).reshape(B, 1)
    a_arr = jnp.reshape(a, (1,)).astype(jnp.float32)

    # --- advisory cost estimate (Python ints) -----------------------------------------
    flops = int(2 * B * F * CONV_P * K            # fused ChebConv+Conv1d matmuls
                + 2 * B * CONV_P * OUT_P          # fused fc1+fc2 matmul
                + 6 * B * F * max(K - 1, 0))      # rank-1 Chebyshev recursion (VPU)
    transcendentals = int(B * OUT_P + B)          # exp + reciprocal
    bytes_accessed = int(B * F * 4 + B * 4 + 4
                         + K * F * CONV_P * 2 + CONV_P * 4
                         + CONV_P * OUT_P * 2 + OUT_P * 4
                         + B * OUT_P * 4)

    vmem = pl.BlockSpec(memory_space=pltpu.MemorySpace.VMEM)
    smem = pl.BlockSpec(memory_space=pltpu.MemorySpace.SMEM)
    kernel = functools.partial(dgcnn_kernel, cheb_k=K)
    out_full = pl.pallas_call(
        kernel,
        out_shape=jax.ShapeDtypeStruct((B, OUT_P), jnp.float32),
        in_specs=[smem, vmem, vmem, vmem, vmem, vmem, vmem],
        out_specs=vmem,
        compiler_params=pltpu.CompilerParams(vmem_limit_bytes=32 * 1024 * 1024),
        cost_estimate=pl.CostEstimate(flops=flops,
                                      transcendentals=transcendentals,
                                      bytes_accessed=bytes_accessed),
    )(a_arr, x, rs, wk_p, bk_p, w12_p, b12_p)

    return out_full[:, :out_channels]             # drop lane padding


def init_params(key, num_features, hid_channels, out_channels, k):
    """Deterministic synthetic parameters matching the module's __init__ shapes,
    stored [in, out] for the kernel (PyTorch Conv1d/Linear store [out, in])."""
    conv1d_out = hid_channels // 2
    fc1_out = conv1d_out // 2
    ks = jax.random.split(key, 8)
    s = 0.1
    return {
        # ChebConv: K linear maps F->hid (PyG: K x Linear(F, hid, bias=False)) + bias[hid]
        "wcheb": s * jax.random.normal(ks[0], (k, num_features, hid_channels), jnp.float32),
        "bcheb": s * jax.random.normal(ks[1], (1, hid_channels), jnp.float32),
        # Conv1d(hid, hid/2, kernel_size=1): weight [hid/2, hid, 1] -> [hid, hid/2]
        "wconv": s * jax.random.normal(ks[2], (hid_channels, conv1d_out), jnp.float32),
        "bconv": s * jax.random.normal(ks[3], (1, conv1d_out), jnp.float32),
        # fc1: Linear(hid/2, hid/4)
        "wfc1": s * jax.random.normal(ks[4], (conv1d_out, fc1_out), jnp.float32),
        "bfc1": s * jax.random.normal(ks[5], (1, fc1_out), jnp.float32),
        # fc2: Linear(hid/4, out_channels)
        "wfc2": s * jax.random.normal(ks[6], (fc1_out, out_channels), jnp.float32),
        "bfc2": s * jax.random.normal(ks[7], (1, out_channels), jnp.float32),
    }


if __name__ == "__main__":
    # Small shapes consistent with the module's __init__ arithmetic.
    batch_size = 8        # also the number of graph nodes (one node per sample)
    num_features = 16
    hid_channels = 32     # -> conv1d_out = 16, fc1_out = 8
    out_channels = 4
    k = 3                 # Chebyshev order K

    key = jax.random.PRNGKey(0)
    kx, kw, kp = jax.random.split(key, 3)

    x = jax.random.normal(kx, (batch_size, num_features), jnp.float32)
    # edge_weight parameter (length B); .repeat(batch_size) fills the B x B adjacency.
    edge_weight = jax.random.uniform(kw, (batch_size,), jnp.float32,
                                     minval=0.05, maxval=1.0)
    params = init_params(kp, num_features, hid_channels, out_channels, k)

    probs = dgcnn_forward(x, edge_weight, params, batch_size=batch_size)
    probs = jax.block_until_ready(probs)

    assert probs.shape == (batch_size, out_channels)
    assert bool(jnp.all(jnp.isfinite(probs)))
    # softmax rows sum to ~1 (approx EUP reciprocal + bf16 MXU operands => loose tol)
    assert bool(jnp.allclose(jnp.sum(probs, axis=1), 1.0, atol=5e-3))
    print("KERNEL_OK")
</pallas_src>

<mosaic_0001>
module attributes {stable_mosaic.version = 11 : i64} {
  func.func @dgcnn_kernel(%arg0: memref<1xf32, #tpu.memory_space<smem>>, %arg1: memref<8x16xf32, #tpu.memory_space<vmem>>, %arg2: memref<8x1xf32, #tpu.memory_space<vmem>>, %arg3: memref<3x16x128xbf16, #tpu.memory_space<vmem>>, %arg4: memref<1x128xf32, #tpu.memory_space<vmem>>, %arg5: memref<128x128xbf16, #tpu.memory_space<vmem>>, %arg6: memref<1x128xf32, #tpu.memory_space<vmem>>, %arg7: memref<8x128xf32, #tpu.memory_space<vmem>>) attributes {dimension_semantics = [], scalar_prefetch = 0 : i64, scratch_operands = 0 : i64, tpu.core_type = #tpu.core_type<tc>} {
    %c0 = arith.constant 0 : index
    %0 = memref.load %arg0[%c0] : memref<1xf32, #tpu.memory_space<smem>>
    %c0_0 = arith.constant 0 : index
    %c0_1 = arith.constant 0 : index
    %1 = vector.load %arg1[%c0_0, %c0_1] : memref<8x16xf32, #tpu.memory_space<vmem>>, vector<8x16xf32>
    %c0_2 = arith.constant 0 : index
    %c0_3 = arith.constant 0 : index
    %2 = vector.load %arg2[%c0_2, %c0_3] : memref<8x1xf32, #tpu.memory_space<vmem>>, vector<8x1xf32>
    %c0_4 = arith.constant 0 : index
    %c0_5 = arith.constant 0 : index
    %3 = vector.load %arg4[%c0_4, %c0_5] : memref<1x128xf32, #tpu.memory_space<vmem>>, vector<1x128xf32>
    %4 = arith.truncf %1 : vector<8x16xf32> to vector<8x16xbf16>
    %c0_6 = arith.constant 0 : index
    %c0_7 = arith.constant 0 : index
    %c0_8 = arith.constant 0 : index
    %5 = vector.load %arg3[%c0_6, %c0_7, %c0_8] : memref<3x16x128xbf16, #tpu.memory_space<vmem>>, vector<1x16x128xbf16>
    %6 = vector.shape_cast %5 : vector<1x16x128xbf16> to vector<16x128xbf16>
    %cst = arith.constant dense<0.000000e+00> : vector<8x128xf32>
    %7 = tpu.matmul %4, %6, %cst {dimension_numbers = #tpu.dot_dimension_numbers<[1], [0], [0], [1], [0, 0, 1, 1], [], []>} : vector<8x16xbf16>, vector<16x128xbf16>, vector<8x128xf32> -> vector<8x128xf32>
    %8 = vector.broadcast %3 : vector<1x128xf32> to vector<8x128xf32>
    %9 = arith.addf %8, %7 : vector<8x128xf32>
    %10 = vector.broadcast %2 : vector<8x1xf32> to vector<8x16xf32>
    %11 = arith.mulf %10, %1 : vector<8x16xf32>
    %cst_9 = arith.constant dense<0.000000e+00> : vector<16xf32>
    %12 = vector.multi_reduction <add>, %11, %cst_9 [0] : vector<8x16xf32> to vector<16xf32>
    %13 = vector.shape_cast %12 : vector<16xf32> to vector<1x16xf32>
    %14 = vector.broadcast %0 : f32 to vector<8x16xf32>
    %15 = arith.mulf %14, %1 : vector<8x16xf32>
    %16 = vector.broadcast %13 : vector<1x16xf32> to vector<8x16xf32>
    %17 = arith.subf %15, %16 : vector<8x16xf32>
    %18 = arith.truncf %17 : vector<8x16xf32> to vector<8x16xbf16>
    %c1 = arith.constant 1 : index
    %c0_10 = arith.constant 0 : index
    %c0_11 = arith.constant 0 : index
    %19 = vector.load %arg3[%c1, %c0_10, %c0_11] : memref<3x16x128xbf16, #tpu.memory_space<vmem>>, vector<1x16x128xbf16>
    %20 = vector.shape_cast %19 : vector<1x16x128xbf16> to vector<16x128xbf16>
    %cst_12 = arith.constant dense<0.000000e+00> : vector<8x128xf32>
    %21 = tpu.matmul %18, %20, %cst_12 {dimension_numbers = #tpu.dot_dimension_numbers<[1], [0], [0], [1], [0, 0, 1, 1], [], []>} : vector<8x16xbf16>, vector<16x128xbf16>, vector<8x128xf32> -> vector<8x128xf32>
    %22 = arith.addf %9, %21 : vector<8x128xf32>
    %23 = vector.broadcast %2 : vector<8x1xf32> to vector<8x16xf32>
    %24 = arith.mulf %23, %17 : vector<8x16xf32>
    %cst_13 = arith.constant dense<0.000000e+00> : vector<16xf32>
    %25 = vector.multi_reduction <add>, %24, %cst_13 [0] : vector<8x16xf32> to vector<16xf32>
    %26 = vector.shape_cast %25 : vector<16xf32> to vector<1x16xf32>
    %27 = vector.broadcast %0 : f32 to vector<8x16xf32>
    %28 = arith.mulf %27, %17 : vector<8x16xf32>
    %29 = vector.broadcast %26 : vector<1x16xf32> to vector<8x16xf32>
    %30 = arith.subf %28, %29 : vector<8x16xf32>
    %cst_14 = arith.constant 2.000000e+00 : f32
    %31 = vector.broadcast %cst_14 : f32 to vector<8x16xf32>
    %32 = arith.mulf %31, %30 : vector<8x16xf32>
    %33 = arith.subf %32, %1 : vector<8x16xf32>
    %34 = arith.truncf %33 : vector<8x16xf32> to vector<8x16xbf16>
    %c2 = arith.constant 2 : index
    %c0_15 = arith.constant 0 : index
    %c0_16 = arith.constant 0 : index
    %35 = vector.load %arg3[%c2, %c0_15, %c0_16] : memref<3x16x128xbf16, #tpu.memory_space<vmem>>, vector<1x16x128xbf16>
    %36 = vector.shape_cast %35 : vector<1x16x128xbf16> to vector<16x128xbf16>
    %cst_17 = arith.constant dense<0.000000e+00> : vector<8x128xf32>
    %37 = tpu.matmul %34, %36, %cst_17 {dimension_numbers = #tpu.dot_dimension_numbers<[1], [0], [0], [1], [0, 0, 1, 1], [], []>} : vector<8x16xbf16>, vector<16x128xbf16>, vector<8x128xf32> -> vector<8x128xf32>
    %38 = arith.addf %22, %37 : vector<8x128xf32>
    %cst_18 = arith.constant 0.000000e+00 : f32
    %39 = vector.broadcast %cst_18 : f32 to vector<8x128xf32>
    %40 = arith.maximumf %38, %39 : vector<8x128xf32>
    %41 = arith.truncf %40 : vector<8x128xf32> to vector<8x128xbf16>
    %c0_19 = arith.constant 0 : index
    %c0_20 = arith.constant 0 : index
    %42 = vector.load %arg5[%c0_19, %c0_20] : memref<128x128xbf16, #tpu.memory_space<vmem>>, vector<128x128xbf16>
    %cst_21 = arith.constant dense<0.000000e+00> : vector<8x128xf32>
    %43 = tpu.matmul %41, %42, %cst_21 {dimension_numbers = #tpu.dot_dimension_numbers<[1], [0], [0], [1], [0, 0, 1, 1], [], []>} : vector<8x128xbf16>, vector<128x128xbf16>, vector<8x128xf32> -> vector<8x128xf32>
    %c0_22 = arith.constant 0 : index
    %c0_23 = arith.constant 0 : index
    %44 = vector.load %arg6[%c0_22, %c0_23] : memref<1x128xf32, #tpu.memory_space<vmem>>, vector<1x128xf32>
    %45 = vector.broadcast %44 : vector<1x128xf32> to vector<8x128xf32>
    %46 = arith.addf %43, %45 : vector<8x128xf32>
    %cst_24 = arith.constant dense<0xFF800000> : vector<8xf32>
    %47 = vector.multi_reduction <maximumf>, %46, %cst_24 [1] : vector<8x128xf32> to vector<8xf32>
    %48 = vector.shape_cast %47 : vector<8xf32> to vector<8x1xf32>
    %49 = vector.broadcast %48 : vector<8x1xf32> to vector<8x128xf32>
    %50 = arith.subf %46, %49 : vector<8x128xf32>
    %51 = math.exp %50 : vector<8x128xf32>
    %cst_25 = arith.constant dense<0.000000e+00> : vector<8xf32>
    %52 = vector.multi_reduction <add>, %51, %cst_25 [1] : vector<8x128xf32> to vector<8xf32>
    %53 = vector.shape_cast %52 : vector<8xf32> to vector<8x1xf32>
    %54 = tpu.reciprocal %53 {approx = true} : vector<8x1xf32> -> vector<8x1xf32>
    %55 = vector.broadcast %54 : vector<8x1xf32> to vector<8x128xf32>
    %56 = arith.mulf %51, %55 : vector<8x128xf32>
    %c0_26 = arith.constant 0 : index
    %c0_27 = arith.constant 0 : index
    %57 = vector.load %arg7[%c0_26, %c0_27] : memref<8x128xf32, #tpu.memory_space<vmem>>, vector<8x128xf32>
    tpu.vector_store %arg7[%c0_26, %c0_27], %56 {strides = array<i32>} : memref<8x128xf32, #tpu.memory_space<vmem>>, vector<8x128xf32>,
    return
  }
}

</mosaic_0001>

<llo_original>
// kernel: dgcnn_forward.1
$region0: #{dgcnn_forward.1}
  #allocation0 [shape = 'u32[]', space=smem, size = 0x4, offset = 0x4, fixed_abs, tag = 'smem constant byte address 0x4 - core index']
  #allocation1 [shape = 'u32[144,128]{1,0:T(1,128)}', space=vmem, size = 0x12000, scoped, tag = 'internal scratch']
  #allocation2 [shape = 'f32[1]{0:T(128)S(6)}', space=smem, size = 0x200, scoped, tag = 'scoped memory for dgcnn_forward.1']
  %s0 = inlined_call_operand.<no memory space> [shape: f32[1], index: 0, kind: input, shape index: {}]
  %s1 = inlined_call_operand.vmem [shape: f32[8,16], index: 1, kind: input, shape index: {}]
  %s2 = inlined_call_operand.vmem [shape: f32[8,1], index: 2, kind: input, shape index: {}]
  %s3 = inlined_call_operand.vmem [shape: bf16[3,16,128], index: 3, kind: input, shape index: {}]
  %s4 = inlined_call_operand.vmem [shape: f32[1,128], index: 4, kind: input, shape index: {}]
  %s5 = inlined_call_operand.vmem [shape: bf16[128,128], index: 5, kind: input, shape index: {}]
  %s6 = inlined_call_operand.vmem [shape: f32[1,128], index: 6, kind: input, shape index: {}]
  %s7 = inlined_call_operand.vmem [shape: f32[8,128], index: 7, kind: output, shape index: {}]
  %s8 = sld [smem:[#allocation0]]
  $region38: #{dgcnn_forward.1} parent=0
    _
  %s10 = ssub.s32 1, %s8
  %s11 = scalar_select 0, %s10, %s8
  %12 = sst [smem:[#allocation2]] %s0
  // Predicated region
  $region2: #{dgcnn_forward.1} parent=0 // pred_check
    _
  $region3: #{dgcnn_forward.1} parent=0 // pred_check_branch
    %14 = sbr.rel (0) target = $region5
  $region4: #{dgcnn_forward.1} parent=0 // pred_region
    _
  $region5: #{dgcnn_forward.1} parent=0 // pred_fallthru
    _
  // Predicated region
  $region6: #{dgcnn_forward.1} parent=0 // pred_check
    _
  $region7: #{dgcnn_forward.1} parent=0 // pred_check_branch
    %16 = sbr.rel (0) target = $region9
  $region8: #{dgcnn_forward.1} parent=0 // pred_region
    _
  $region9: #{dgcnn_forward.1} parent=0 // pred_fallthru
    _
  // Predicated region
  $region10: #{dgcnn_forward.1} parent=0 // pred_check
    _
  $region11: #{dgcnn_forward.1} parent=0 // pred_check_branch
    %18 = sbr.rel (0) target = $region13
  $region12: #{dgcnn_forward.1} parent=0 // pred_region
    _
  $region13: #{dgcnn_forward.1} parent=0 // pred_fallthru
    _
  // Predicated region
  $region14: #{dgcnn_forward.1} parent=0 // pred_check
    _
  $region15: #{dgcnn_forward.1} parent=0 // pred_check_branch
    %20 = sbr.rel (0) target = $region17
  $region16: #{dgcnn_forward.1} parent=0 // pred_region
    _
  $region17: #{dgcnn_forward.1} parent=0 // pred_fallthru
    _
  // Predicated region
  $region18: #{dgcnn_forward.1} parent=0 // pred_check
    _
  $region19: #{dgcnn_forward.1} parent=0 // pred_check_branch
    %22 = sbr.rel (0) target = $region21
  $region20: #{dgcnn_forward.1} parent=0 // pred_region
    _
  $region21: #{dgcnn_forward.1} parent=0 // pred_fallthru
    _
  // Predicated region
  $region22: #{dgcnn_forward.1} parent=0 // pred_check
    _
  $region23: #{dgcnn_forward.1} parent=0 // pred_check_branch
    %24 = sbr.rel (0) target = $region25
  $region24: #{dgcnn_forward.1} parent=0 // pred_region
    _
  $region25: #{dgcnn_forward.1} parent=0 // pred_fallthru
    _
  // Predicated region
  $region26: #{dgcnn_forward.1} parent=0 // pred_check
    _
  $region27: #{dgcnn_forward.1} parent=0 // pred_check_branch
    %26 = sbr.rel (0) target = $region29
  $region28: #{dgcnn_forward.1} parent=0 // pred_region
    _
  $region29: #{dgcnn_forward.1} parent=0 // pred_fallthru
    _
  %s28 = sld [smem:[#allocation2]]
  %v29 = vld [vmem:[%s1] sm:$0xff]
  %v30 = vld [vmem:[%s2] sm:$0xff]
  %v31 = vld [vmem:[%s4] sm:$0x1]
  %v32 = vpack.c.bf16 %v29, %v29
  %v33 = vld [vmem:[%s3] sm:$0xf]
  %v34 = vld [vmem:[%s3 + $0x4] sm:$0xf]
  %v37 = vunpack.c.l.b16 %v33
  %v38 = vunpack.c.l.b16 %v34
  %v39 = vpack.c.b16 %v38, %v37
  %vm41 = vcmask 130048
  %v43 = vsel %vm41, %v32, 0
  %45 = vmatprep.subr.bf16.mxu0 0
  %46 = vmatpush1.bf16.msra.mxu0 %v39
  %47 = vmatprep.subr.bf16.mxu0 0
  %48 = vmatpush1.bf16.msra.mxu0 0
  %49 = vmatprep.subr.bf16.mxu0 0
  %50 = vmatpush1.bf16.msra.mxu0 0
  %51 = vmatprep.subr.bf16.mxu0 0
  %52 = vmatpush1.bf16.msra.mxu0 0
  %53 = vmatprep.subr.bf16.mxu0 0
  %54 = vmatpush1.bf16.msra.mxu0 0
  %55 = vmatprep.subr.bf16.mxu0 0
  %56 = vmatpush1.bf16.msra.mxu0 0
  %57 = vmatprep.subr.bf16.mxu0 0
  %58 = vmatpush1.bf16.msra.mxu0 0
  %59 = vmatprep.subr.bf16.mxu0 0
  %60 = vmatpush1.bf16.msra.mxu0 0
  %61 = vmatprep.subr.bf16.mxu0 0
  %62 = vmatpush1.bf16.msra.mxu0 0
  %63 = vmatprep.subr.bf16.mxu0 0
  %64 = vmatpush1.bf16.msra.mxu0 0
  %65 = vmatprep.subr.bf16.mxu0 0
  %66 = vmatpush1.bf16.msra.mxu0 0
  %67 = vmatprep.subr.bf16.mxu0 0
  %68 = vmatpush1.bf16.msra.mxu0 0
  %69 = vmatprep.subr.bf16.mxu0 0
  %70 = vmatpush1.bf16.msra.mxu0 0
  %71 = vmatprep.subr.bf16.mxu0 0
  %72 = vmatpush1.bf16.msra.mxu0 0
  %73 = vmatprep.subr.bf16.mxu0 0
  %74 = vmatpush1.bf16.msra.mxu0 0
  %75 = vmatprep.subr.bf16.mxu0 0
  %76 = vmatpush1.bf16.msra.mxu0 0
  %77 = vmatprep.mubr.bf16.mxu0 0
  %78 = vmatmul.mubr.bf16.gmra.mrb[0].mxu0 %v43
  %v79 = vpop.f32.mrb[0].mxu0
  %v80 = vadd.f32 0.0, %v79
  %v81 = vpop.f32.mrb[0].mxu0
  %v82 = vpop.f32.mrb[0].mxu0
  %v83 = vpop.f32.mrb[0].mxu0
  %84 = vdwg.mxu0
  %v86 = vlaneseq
  %v87 = vshrl.u32 %v86, 7
  %v88 = vsub.s32 0, %v87
  %v89 = vrot.slane %v31, %v88
  %v91 = vadd.f32 %v89, %v80
  %93 = vset.pattern.permute.xlu0 0
  %94 = vperm.xlu0 %93, %v30
  %v95 = vpop.permute.xlu0 %94
  %v97 = vmul.f32 %v95, %v29
  %v98 = vsel %vm41, %v97, 0.0
  %v99 = vrot.slane %v98, 4
  %v100 = vadd.f32 %v98, %v99
  %v101 = vrot.slane %v100, 2
  %v102 = vadd.f32 %v100, %v101
  %v103 = vrot.slane %v102, 1
  %v104 = vadd.f32 %v102, %v103
  %v105 = vstv %s28
  %v106 = vmul.f32 %v105, %v29
  %v107 = vsub.f32 %v106, %v104
  %v108 = vpack.c.bf16 %v107, %v107
  %s109 = scalar_lea.vmem %s3, 8
  %v110 = vld [vmem:[%s109] sm:$0xf]
  %v111 = vld [vmem:[%s109 + $0x4] sm:$0xf]
  %v114 = vunpack.c.l.b16 %v110
  %v115 = vunpack.c.l.b16 %v111
  %v116 = vpack.c.b16 %v115, %v114
  %v119 = vsel %vm41, %v108, 0
  %121 = vmatprep.subr.bf16.mxu0 0
  %122 = vmatpush1.bf16.msra.mxu0 %v116
  %123 = vmatprep.subr.bf16.mxu0 0
  %124 = vmatpush1.bf16.msra.mxu0 0
  %125 = vmatprep.subr.bf16.mxu0 0
  %126 = vmatpush1.bf16.msra.mxu0 0
  %127 = vmatprep.subr.bf16.mxu0 0
  %128 = vmatpush1.bf16.msra.mxu0 0
  %129 = vmatprep.subr.bf16.mxu0 0
  %130 = vmatpush1.bf16.msra.mxu0 0
  %131 = vmatprep.subr.bf16.mxu0 0
  %132 = vmatpush1.bf16.msra.mxu0 0
  %133 = vmatprep.subr.bf16.mxu0 0
  %134 = vmatpush1.bf16.msra.mxu0 0
  %135 = vmatprep.subr.bf16.mxu0 0
  %136 = vmatpush1.bf16.msra.mxu0 0
  %137 = vmatprep.subr.bf16.mxu0 0
  %138 = vmatpush1.bf16.msra.mxu0 0
  %139 = vmatprep.subr.bf16.mxu0 0
  %140 = vmatpush1.bf16.msra.mxu0 0
  %141 = vmatprep.subr.bf16.mxu0 0
  %142 = vmatpush1.bf16.msra.mxu0 0
  %143 = vmatprep.subr.bf16.mxu0 0
  %144 = vmatpush1.bf16.msra.mxu0 0
  %145 = vmatprep.subr.bf16.mxu0 0
  %146 = vmatpush1.bf16.msra.mxu0 0
  %147 = vmatprep.subr.bf16.mxu0 0
  %148 = vmatpush1.bf16.msra.mxu0 0
  %149 = vmatprep.subr.bf16.mxu0 0
  %150 = vmatpush1.bf16.msra.mxu0 0
  %151 = vmatprep.subr.bf16.mxu0 0
  %152 = vmatpush1.bf16.msra.mxu0 0
  %153 = vmatprep.mubr.bf16.mxu0 0
  %154 = vmatmul.mubr.bf16.gmra.mrb[0].mxu0 %v119
  %v155 = vpop.f32.mrb[0].mxu0
  %v156 = vadd.f32 0.0, %v155
  %v157 = vpop.f32.mrb[0].mxu0
  %v158 = vpop.f32.mrb[0].mxu0
  %v159 = vpop.f32.mrb[0].mxu0
  %160 = vdwg.mxu0
  %v161 = vadd.f32 %v91, %v156
  %v162 = vmul.f32 %v95, %v107
  %v163 = vsel %vm41, %v162, 0.0
  %v164 = vrot.slane %v163, 4
  %v165 = vadd.f32 %v163, %v164
  %v166 = vrot.slane %v165, 2
  %v167 = vadd.f32 %v165, %v166
  %v168 = vrot.slane %v167, 1
  %v169 = vadd.f32 %v167, %v168
  %v170 = vmul.f32 %v105, %v107
  %v171 = vsub.f32 %v170, %v169
  %v172 = vmul.f32 %v171, 2.0
  %v173 = vsub.f32 %v172, %v29
  %v174 = vpack.c.bf16 %v173, %v173
  %s175 = scalar_lea.vmem %s3, 16
  %v176 = vld [vmem:[%s175] sm:$0xf]
  %v177 = vld [vmem:[%s175 + $0x4] sm:$0xf]
  %v180 = vunpack.c.l.b16 %v176
  %v181 = vunpack.c.l.b16 %v177
  %v182 = vpack.c.b16 %v181, %v180
  %v185 = vsel %vm41, %v174, 0
  %187 = vmatprep.subr.bf16.mxu0 0
  %188 = vmatpush1.bf16.msra.mxu0 %v182
  %189 = vmatprep.subr.bf16.mxu0 0
  %190 = vmatpush1.bf16.msra.mxu0 0
  %191 = vmatprep.subr.bf16.mxu0 0
  %192 = vmatpush1.bf16.msra.mxu0 0
  %193 = vmatprep.subr.bf16.mxu0 0
  %194 = vmatpush1.bf16.msra.mxu0 0
  %195 = vmatprep.subr.bf16.mxu0 0
  %196 = vmatpush1.bf16.msra.mxu0 0
  %197 = vmatprep.subr.bf16.mxu0 0
  %198 = vmatpush1.bf16.msra.mxu0 0
  %199 = vmatprep.subr.bf16.mxu0 0
  %200 = vmatpush1.bf16.msra.mxu0 0
  %201 = vmatprep.subr.bf16.mxu0 0
  %202 = vmatpush1.bf16.msra.mxu0 0
  %203 = vmatprep.subr.bf16.mxu0 0
  %204 = vmatpush1.bf16.msra.mxu0 0
  %205 = vmatprep.subr.bf16.mxu0 0
  %206 = vmatpush1.bf16.msra.mxu0 0
  %207 = vmatprep.subr.bf16.mxu0 0
  %208 = vmatpush1.bf16.msra.mxu0 0
  %209 = vmatprep.subr.bf16.mxu0 0
  %210 = vmatpush1.bf16.msra.mxu0 0
  %211 = vmatprep.subr.bf16.mxu0 0
  %212 = vmatpush1.bf16.msra.mxu0 0
  %213 = vmatprep.subr.bf16.mxu0 0
  %214 = vmatpush1.bf16.msra.mxu0 0
  %215 = vmatprep.subr.bf16.mxu0 0
  %216 = vmatpush1.bf16.msra.mxu0 0
  %217 = vmatprep.subr.bf16.mxu0 0
  %218 = vmatpush1.bf16.msra.mxu0 0
  %219 = vmatprep.mubr.bf16.mxu0 0
  %220 = vmatmul.mubr.bf16.gmra.mrb[0].mxu0 %v185
  %v221 = vpop.f32.mrb[0].mxu0
  %v222 = vadd.f32 0.0, %v221
  %v223 = vpop.f32.mrb[0].mxu0
  %v224 = vpop.f32.mrb[0].mxu0
  %v225 = vpop.f32.mrb[0].mxu0
  %226 = vdwg.mxu0
  %v227 = vadd.f32 %v161, %v222
  %v228 = vmax.f32 %v227, 0.0
  %v229 = vpack.c.bf16 %v228, %v228
  %v230 = vld [vmem:[%s5] sm:$0xf]
  %v231 = vld [vmem:[%s5 + $0x4] sm:$0xf]
  %v232 = vld [vmem:[%s5 + $0x8] sm:$0xf]
  %v233 = vld [vmem:[%s5 + $0xc] sm:$0xf]
  %v234 = vld [vmem:[%s5 + $0x10] sm:$0xf]
  %v235 = vld [vmem:[%s5 + $0x14] sm:$0xf]
  %v236 = vld [vmem:[%s5 + $0x18] sm:$0xf]
  %v237 = vld [vmem:[%s5 + $0x1c] sm:$0xf]
  %v238 = vld [vmem:[%s5 + $0x20] sm:$0xf]
  %v239 = vld [vmem:[%s5 + $0x24] sm:$0xf]
  %v240 = vld [vmem:[%s5 + $0x28] sm:$0xf]
  %v241 = vld [vmem:[%s5 + $0x2c] sm:$0xf]
  %v242 = vld [vmem:[%s5 + $0x30] sm:$0xf]
  %v243 = vld [vmem:[%s5 + $0x34] sm:$0xf]
  %v244 = vld [vmem:[%s5 + $0x38] sm:$0xf]
  %v245 = vld [vmem:[%s5 + $0x3c] sm:$0xf]
  %v246 = vld [vmem:[%s6] sm:$0x1]
  %v248 = vlaneseq
  %v249 = vshrl.u32 %v248, 7
  %v250 = vsub.s32 0, %v249
  %v251 = vrot.slane %v246, %v250
  %v269 = vunpack.c.l.b16 %v230
  %v270 = vunpack.c.l.b16 %v231
  %v271 = vunpack.c.l.b16 %v232
  %v272 = vunpack.c.l.b16 %v233
  %v273 = vunpack.c.l.b16 %v234
  %v274 = vunpack.c.l.b16 %v235
  %v275 = vunpack.c.l.b16 %v236
  %v276 = vunpack.c.l.b16 %v237
  %v277 = vunpack.c.l.b16 %v238
  %v278 = vunpack.c.l.b16 %v239
  %v279 = vunpack.c.l.b16 %v240
  %v280 = vunpack.c.l.b16 %v241
  %v281 = vunpack.c.l.b16 %v242
  %v282 = vunpack.c.l.b16 %v243
  %v283 = vunpack.c.l.b16 %v244
  %v284 = vunpack.c.l.b16 %v245
  %v285 = vpack.c.b16 %v270, %v269
  %v286 = vpack.c.b16 %v272, %v271
  %v287 = vpack.c.b16 %v274, %v273
  %v288 = vpack.c.b16 %v276, %v275
  %v289 = vpack.c.b16 %v278, %v277
  %v290 = vpack.c.b16 %v280, %v279
  %v291 = vpack.c.b16 %v282, %v281
  %v292 = vpack.c.b16 %v284, %v283
  %301 = vmatprep.subr.bf16.mxu0 0
  %302 = vmatpush1.bf16.msra.mxu0 %v285
  %303 = vmatprep.subr.bf16.mxu0 0
  %304 = vmatpush1.bf16.msra.mxu0 %v286
  %305 = vmatprep.subr.bf16.mxu0 0
  %306 = vmatpush1.bf16.msra.mxu0 %v287
  %307 = vmatprep.subr.bf16.mxu0 0
  %308 = vmatpush1.bf16.msra.mxu0 %v288
  %309 = vmatprep.subr.bf16.mxu0 0
  %310 = vmatpush1.bf16.msra.mxu0 %v289
  %311 = vmatprep.subr.bf16.mxu0 0
  %312 = vmatpush1.bf16.msra.mxu0 %v290
  %313 = vmatprep.subr.bf16.mxu0 0
  %314 = vmatpush1.bf16.msra.mxu0 %v291
  %315 = vmatprep.subr.bf16.mxu0 0
  %316 = vmatpush1.bf16.msra.mxu0 %v292
  %317 = vmatprep.subr.bf16.mxu0 0
  %318 = vmatpush1.bf16.msra.mxu0 0
  %319 = vmatprep.subr.bf16.mxu0 0
  %320 = vmatpush1.bf16.msra.mxu0 0
  %321 = vmatprep.subr.bf16.mxu0 0
  %322 = vmatpush1.bf16.msra.mxu0 0
  %323 = vmatprep.subr.bf16.mxu0 0
  %324 = vmatpush1.bf16.msra.mxu0 0
  %325 = vmatprep.subr.bf16.mxu0 0
  %326 = vmatpush1.bf16.msra.mxu0 0
  %327 = vmatprep.subr.bf16.mxu0 0
  %328 = vmatpush1.bf16.msra.mxu0 0
  %329 = vmatprep.subr.bf16.mxu0 0
  %330 = vmatpush1.bf16.msra.mxu0 0
  %331 = vmatprep.subr.bf16.mxu0 0
  %332 = vmatpush1.bf16.msra.mxu0 0
  %333 = vmatprep.mubr.bf16.mxu0 0
  %334 = vmatmul.mubr.bf16.gmra.mrb[0].mxu0 %v229
  %v335 = vpop.f32.mrb[0].mxu0
  %v336 = vadd.f32 %v251, %v335
  %v337 = vpop.f32.mrb[0].mxu0
  %v338 = vpop.f32.mrb[0].mxu0
  %v339 = vpop.f32.mrb[0].mxu0
  %340 = vdwg.mxu0
  %341 = vmax.xlane.f32.xlu0 %v336
  %v342 = vpop.xlane.xlu0 %341
  %v343 = vsub.f32 %v336, %v342
  %v344 = vmul.f32 %v343, 1.442695
  %v345 = vpow.pop %v344
  %346 = vadd.xlane.f32.xlu0 %v345
  %v347 = vpop.xlane.xlu0 %346
  %v348 = vrcp.pop %v347
  %v349 = vmul.f32 %v345, %v348
  %350 = vst [vmem:[%s7] sm:$0xff] %v349
  // Predicated region
  $region30: #{dgcnn_forward.1} parent=0 // pred_check
    _
  $region31: #{dgcnn_forward.1} parent=0 // pred_check_branch
    %352 = sbr.rel (0) target = $region33
  $region32: #{dgcnn_forward.1} parent=0 // pred_region
    _
  $region33: #{dgcnn_forward.1} parent=0 // pred_fallthru
    _
  // Predicated region
  $region34: #{dgcnn_forward.1} parent=0 // pred_check
    _
  $region35: #{dgcnn_forward.1} parent=0 // pred_check_branch
    %354 = sbr.rel (0) target = $region37
  $region36: #{dgcnn_forward.1} parent=0 // pred_region
    _
  $region37: #{dgcnn_forward.1} parent=0 // pred_fallthru
    _

</llo_original>
